<compile_context>
chip_gen: v7x
topology: tpu7x:2x2x1
jax: 0.10.0
libtpu: 0.0.40
codegen_flags: <defaults>
</compile_context>

<pallas_src>
import math

import jax
import jax.numpy as jnp
from jax.experimental import pallas as pl
from jax.experimental.pallas import tpu as pltpu


def _round_up(x, m):
    return ((x + m - 1) // m) * m


# Spatial padding / tile granularity: 32 sublanes x 128 lanes.  Keeps the
# second-minor dim of every block a multiple of 32, which is aligned for f32,
# bf16 (16) and int8 (32) sublane packing, and makes the in-vreg fold exact.
_LANE_ALIGN = 4096
_TARGET_TILE_BYTES = 8 * 1024 * 1024   # pred bytes per grid step (amortizes the
                                       # ~0.35us/step grid overhead to <10%)


def _chunk_rows(C):
    # Sublane rows per in-kernel compute chunk: ~1 MiB of f32 temporaries per
    # whole-chunk intermediate, independent of the (large) DMA tile size.
    r = (1 << 20) // (C * 128 * 4)
    return max(32, min(256, (r // 32) * 32))


def _make_dice_kernel(C, r_tile, n_hw_per, has_pad, first_pad_tile, chunk_r):
    """Build the streaming dice-stats kernel for fixed static tiling params."""

    def kernel(pred_ref, tgt_ref, out_ref, acc_i, acc_u):
        # pred_ref : (1, C, r_tile, 128) native float dtype (f32 / bf16) logits
        # tgt_ref  : (1, 1, r_tile, 128) int8/int32 labels, -1 marks padding
        # out_ref  : (1, 1, 2, C) f32 -- row 0 = intersection, row 1 = union
        # acc_i/u  : (C, 8, 128) f32 accumulators, live across the HW tiles
        s = pl.program_id(1)
        h = pl.program_id(2)

        @pl.when(h == 0)
        def _init():
            acc_i[...] = jnp.zeros_like(acc_i)
            acc_u[...] = jnp.zeros_like(acc_u)

        def accumulate_tile(mask_pad):
            # Walk the resident VMEM tile in sublane chunks so f32 temporaries
            # stay small; everything below is VPU/EUP elementwise work.
            for off in range(0, r_tile, chunk_r):
                cr = min(chunk_r, r_tile - off)                         # mult of 32
                p = pred_ref[0, :, off:off + cr, :].astype(jnp.float32)  # (C,cr,128)
                t = tgt_ref[0, 0, off:off + cr, :].astype(jnp.int32)     # (cr,128)

                # Numerically stable softmax over the (leading, untiled) class
                # axis -- plain VPU ops across the C slabs, exp/recip on EUP.
                m = jnp.max(p, axis=0, keepdims=True)
                e = jnp.exp(p - m)
                denom = jnp.sum(e, axis=0, keepdims=True)
                sm = e * pl.reciprocal(denom, approx=True)               # (C,cr,128)

                cls_ids = jax.lax.broadcasted_iota(jnp.int32, sm.shape, 0)
                match = cls_ids == t[None]          # one-hot as a mask, no floats

                if mask_pad:
                    # Padded pixels (label == -1) must not contribute their
                    # softmax mass to the union; match already excludes them
                    # from the intersection / one-hot count.
                    sm_u = jnp.where(t[None] >= 0, sm, 0.0)
                else:
                    sm_u = sm

                inter_elem = jnp.where(match, sm, 0.0)
                union_elem = jnp.where(match, sm_u + 1.0, sm_u)

                # Fold (C, cr, 128) -> (C, 8, 128) in vregs (sublane-group
                # adds), then one small accumulator update per chunk.
                acc_i[...] += inter_elem.reshape(C, cr // 8, 8, 128).sum(axis=1)
                acc_u[...] += union_elem.reshape(C, cr // 8, 8, 128).sum(axis=1)

        if not has_pad:
            accumulate_tile(False)
        elif first_pad_tile <= 0:
            accumulate_tile(True)       # every tile may contain padding (tiny HW)
        else:
            g = s * n_hw_per + h        # global HW-tile index for this sample

            @pl.when(g < first_pad_tile)
            def _steady():
                accumulate_tile(False)

            @pl.when(g >= first_pad_tile)
            def _padded():
                accumulate_tile(True)

        @pl.when(h == pl.num_programs(2) - 1)
        def _finalize():
            # Deferred cross-lane/sublane collapse, once per (sample, split).
            inter = jnp.sum(jnp.sum(acc_i[...], axis=-1), axis=-1)   # (C,)
            union = jnp.sum(jnp.sum(acc_u[...], axis=-1), axis=-1)   # (C,)
            out_ref[0, 0, 0, :] = inter
            out_ref[0, 0, 1, :] = union

    return kernel


def _choose_tiling(C, HW, itemsize):
    """Pick (n_split, n_tiles, hw_tile, hw_pad) for the streaming grid."""
    # 2-way split of each sample's HW range so both v7x TensorCores are busy
    # even at batch 1; harmless (one extra tiny finalize) on 1-TC chips.
    n_split = 2 if HW > _LANE_ALIGN else 1
    n_tiles = max(1, math.ceil((C * HW * itemsize) / _TARGET_TILE_BYTES))
    n_tiles = _round_up(max(n_tiles, n_split), n_split)
    hw_tile = _round_up(math.ceil(HW / n_tiles), _LANE_ALIGN)
    n_tiles = max(1, math.ceil(HW / hw_tile))
    n_tiles = _round_up(max(n_tiles, n_split), n_split)
    hw_pad = n_tiles * hw_tile
    return n_split, n_tiles, hw_tile, hw_pad


def dice_loss(pred, target, smooth=1.0):
    """pred: (N, C, H, W) float logits (f32 or bf16); target: (N, H, W) int labels."""
    N, C, H, W = pred.shape
    HW = H * W

    if not jnp.issubdtype(pred.dtype, jnp.floating):
        pred = pred.astype(jnp.float32)
    itemsize = jnp.dtype(pred.dtype).itemsize

    n_split, n_tiles, hw_tile, hw_pad = _choose_tiling(C, HW, itemsize)
    r_tile = hw_tile // 128
    r_pad = hw_pad // 128
    n_hw_per = n_tiles // n_split
    has_pad = hw_pad != HW
    first_pad_tile = HW // hw_tile          # first HW tile that touches padding
    chunk_r = _chunk_rows(C)

    # Narrow the label stream: -1 pad sentinel and labels 0..C-1 fit in int8
    # while C <= 127 -> 4x less label HBM traffic on mem-bound v5e/v6e.
    tgt_dtype = jnp.int8 if C <= 127 else jnp.int32

    pred_flat = pred.reshape(N, C, HW)
    tgt_flat = target.reshape(N, 1, HW).astype(tgt_dtype)
    if has_pad:
        pad = hw_pad - HW
        pred_flat = jnp.pad(pred_flat, ((0, 0), (0, 0), (0, pad)))
        tgt_flat = jnp.pad(tgt_flat, ((0, 0), (0, 0), (0, pad)),
                           constant_values=-1)
    pred4 = pred_flat.reshape(N, C, r_pad, 128)   # lane-dense spatial layout
    tgt4 = tgt_flat.reshape(N, 1, r_pad, 128)

    kernel = _make_dice_kernel(C, r_tile, n_hw_per, has_pad, first_pad_tile,
                               chunk_r)

    stats = pl.pallas_call(
        kernel,
        out_shape=jax.ShapeDtypeStruct((N, n_split, 2, C), jnp.float32),
        grid_spec=pltpu.PrefetchScalarGridSpec(
            num_scalar_prefetch=0,
            grid=(N, n_split, n_hw_per),
            in_specs=[
                pl.BlockSpec((1, C, r_tile, 128),
                             lambda n, s, h: (n, 0, s * n_hw_per + h, 0)),
                pl.BlockSpec((1, 1, r_tile, 128),
                             lambda n, s, h: (n, 0, s * n_hw_per + h, 0)),
            ],
            out_specs=pl.BlockSpec((1, 1, 2, C), lambda n, s, h: (n, s, 0, 0)),
            scratch_shapes=[
                pltpu.VMEM((C, 8, 128), jnp.float32),   # intersection acc
                pltpu.VMEM((C, 8, 128), jnp.float32),   # union acc
            ],
        ),
        compiler_params=pltpu.CompilerParams(
            dimension_semantics=("parallel", "parallel", "arbitrary"),
            vmem_limit_bytes=48 * 1024 * 1024,   # ~25 MiB actual footprint
        ),
    )(pred4, tgt4)

    inter = jnp.sum(stats[:, :, 0, :], axis=1)   # (N, C), sum over HW splits
    union = jnp.sum(stats[:, :, 1, :], axis=1)
    dice_score = (2.0 * inter + smooth) / (union + smooth)
    return 1.0 - jnp.mean(dice_score)


def _dice_loss_ref(pred, target, smooth=1.0):
    # Pure-JAX reference mirroring the PyTorch module.
    N, C, H, W = pred.shape
    onehot = jax.nn.one_hot(target, C, dtype=jnp.float32)          # (N,H,W,C)
    onehot = jnp.transpose(onehot, (0, 3, 1, 2))                   # (N,C,H,W)
    sm = jax.nn.softmax(pred.astype(jnp.float32), axis=1)
    inter = jnp.sum(sm * onehot, axis=(2, 3))
    union = jnp.sum(sm, axis=(2, 3)) + jnp.sum(onehot, axis=(2, 3))
    dice = (2.0 * inter + smooth) / (union + smooth)
    return 1.0 - jnp.mean(dice)


if __name__ == "__main__":
    key = jax.random.PRNGKey(0)
    k1, k2, k3, k4 = jax.random.split(key, 4)

    # Primary small test (shapes implied by the module): N=2, C=4, 16x16.
    N, C, H, W = 2, 4, 16, 16
    pred = jax.random.normal(k1, (N, C, H, W), dtype=jnp.float32)
    target = jax.random.randint(k2, (N, H, W), 0, C, dtype=jnp.int32)

    loss = jax.block_until_ready(dice_loss(pred, target, smooth=1.0))
    ref = jax.block_until_ready(_dice_loss_ref(pred, target, smooth=1.0))
    # Tolerance loosened slightly because of pl.reciprocal(approx=True).
    assert jnp.allclose(loss, ref, atol=2e-3, rtol=2e-3), (loss, ref)

    # Secondary test: bf16 inputs, batch 1, HW not a multiple of the tile ->
    # exercises the 2-way HW core split, multi-tile accumulation and the
    # steady/padded pl.when paths.
    N2, C2, H2, W2 = 1, 4, 520, 520
    pred2 = jax.random.normal(k3, (N2, C2, H2, W2), dtype=jnp.bfloat16)
    target2 = jax.random.randint(k4, (N2, H2, W2), 0, C2, dtype=jnp.int32)

    loss2 = jax.block_until_ready(dice_loss(pred2, target2, smooth=1.0))
    ref2 = jax.block_until_ready(_dice_loss_ref(pred2, target2, smooth=1.0))
    assert jnp.allclose(loss2, ref2, atol=2e-3, rtol=2e-3), (loss2, ref2)

    print("KERNEL_OK")
</pallas_src>

<mosaic_0001>
module attributes {stable_mosaic.version = 11 : i64} {
  func.func @kernel(%arg0: i32, %arg1: i32, %arg2: i32, %arg3: memref<1x4x32x128xf32, #tpu.memory_space<vmem>>, %arg4: memref<1x1x32x128xi8, #tpu.memory_space<vmem>>, %arg5: memref<1x1x2x4xf32, #tpu.memory_space<vmem>>, %arg6: memref<4x8x128xf32, #tpu.memory_space<vmem>>, %arg7: memref<4x8x128xf32, #tpu.memory_space<vmem>>) attributes {dimension_semantics = [#tpu.dimension_semantics<parallel>, #tpu.dimension_semantics<parallel>, #tpu.dimension_semantics<arbitrary>], iteration_bounds = array<i64: 2, 1, 1>, scalar_prefetch = 0 : i64, scratch_operands = 2 : i64, tpu.core_type = #tpu.core_type<tc>, window_params = [{transform_indices = @transform_0, window_bounds = array<i64: 1, 4, 32, 128>}, {transform_indices = @transform_1, window_bounds = array<i64: 1, 1, 32, 128>}, {transform_indices = @transform_2, window_bounds = array<i64: 1, 1, 2, 4>}]} {
    %c0_i32 = arith.constant 0 : i32
    %0 = arith.cmpi eq, %arg2, %c0_i32 : i32
    %1 = arith.extui %0 : i1 to i32
    %c0_i32_0 = arith.constant 0 : i32
    %2 = arith.cmpi ne, %1, %c0_i32_0 : i32
    scf.if %2 {
      %cst_29 = arith.constant 0.000000e+00 : f32
      %47 = vector.broadcast %cst_29 : f32 to vector<4x8x128xf32>
      %c0_30 = arith.constant 0 : index
      %c0_31 = arith.constant 0 : index
      %c0_32 = arith.constant 0 : index
      %48 = vector.load %arg6[%c0_30, %c0_31, %c0_32] : memref<4x8x128xf32, #tpu.memory_space<vmem>>, vector<4x8x128xf32>
      tpu.vector_store %arg6[%c0_30, %c0_31, %c0_32], %47 {strides = array<i32>} : memref<4x8x128xf32, #tpu.memory_space<vmem>>, vector<4x8x128xf32>,
      %cst_33 = arith.constant 0.000000e+00 : f32
      %49 = vector.broadcast %cst_33 : f32 to vector<4x8x128xf32>
      %c0_34 = arith.constant 0 : index
      %c0_35 = arith.constant 0 : index
      %c0_36 = arith.constant 0 : index
      %50 = vector.load %arg7[%c0_34, %c0_35, %c0_36] : memref<4x8x128xf32, #tpu.memory_space<vmem>>, vector<4x8x128xf32>
      tpu.vector_store %arg7[%c0_34, %c0_35, %c0_36], %49 {strides = array<i32>} : memref<4x8x128xf32, #tpu.memory_space<vmem>>, vector<4x8x128xf32>,
    } else {
    }
    %c0 = arith.constant 0 : index
    %c0_1 = arith.constant 0 : index
    %c0_2 = arith.constant 0 : index
    %c0_3 = arith.constant 0 : index
    %3 = vector.load %arg3[%c0, %c0_1, %c0_2, %c0_3] : memref<1x4x32x128xf32, #tpu.memory_space<vmem>>, vector<1x4x32x128xf32>
    %4 = vector.shape_cast %3 : vector<1x4x32x128xf32> to vector<4x32x128xf32>
    %c0_4 = arith.constant 0 : index
    %c0_5 = arith.constant 0 : index
    %c0_6 = arith.constant 0 : index
    %c0_7 = arith.constant 0 : index
    %5 = vector.load %arg4[%c0_4, %c0_5, %c0_6, %c0_7] : memref<1x1x32x128xi8, #tpu.memory_space<vmem>>, vector<1x1x32x128xi8>
    %6 = vector.shape_cast %5 : vector<1x1x32x128xi8> to vector<32x128xi8>
    %7 = arith.extsi %6 : vector<32x128xi8> to vector<32x128xi32>
    %cst = arith.constant dense<0xFF800000> : vector<32x128xf32>
    %8 = vector.multi_reduction <maximumf>, %4, %cst [0] : vector<4x32x128xf32> to vector<32x128xf32>
    %9 = vector.shape_cast %8 : vector<32x128xf32> to vector<1x32x128xf32>
    %10 = vector.broadcast %9 : vector<1x32x128xf32> to vector<4x32x128xf32>
    %11 = arith.subf %4, %10 : vector<4x32x128xf32>
    %12 = math.exp %11 : vector<4x32x128xf32>
    %cst_8 = arith.constant dense<0.000000e+00> : vector<32x128xf32>
    %13 = vector.multi_reduction <add>, %12, %cst_8 [0] : vector<4x32x128xf32> to vector<32x128xf32>
    %14 = vector.shape_cast %13 : vector<32x128xf32> to vector<1x32x128xf32>
    %15 = tpu.reciprocal %14 {approx = true} : vector<1x32x128xf32> -> vector<1x32x128xf32>
    %16 = vector.broadcast %15 : vector<1x32x128xf32> to vector<4x32x128xf32>
    %17 = arith.mulf %12, %16 : vector<4x32x128xf32>
    %18 = tpu.iota {dimensions = array<i32: 0>} : vector<4x32x128xi32>
    %19 = vector.shape_cast %7 : vector<32x128xi32> to vector<1x32x128xi32>
    %20 = vector.broadcast %19 : vector<1x32x128xi32> to vector<4x32x128xi32>
    %21 = arith.cmpi eq, %18, %20 : vector<4x32x128xi32>
    %22 = vector.shape_cast %7 : vector<32x128xi32> to vector<1x32x128xi32>
    %c0_i32_9 = arith.constant 0 : i32
    %23 = vector.broadcast %c0_i32_9 : i32 to vector<1x32x128xi32>
    %24 = arith.cmpi sge, %22, %23 : vector<1x32x128xi32>
    %cst_10 = arith.constant 0.000000e+00 : f32
    %25 = vector.shape_cast %24 : vector<1x32x128xi1> to vector<1x32x128xi1>
    %26 = vector.broadcast %25 : vector<1x32x128xi1> to vector<4x32x128xi1>
    %27 = vector.broadcast %cst_10 : f32 to vector<4x32x128xf32>
    %28 = arith.select %26, %17, %27 : vector<4x32x128xi1>, vector<4x32x128xf32>
    %cst_11 = arith.constant 0.000000e+00 : f32
    %29 = vector.broadcast %cst_11 : f32 to vector<4x32x128xf32>
    %30 = arith.select %21, %17, %29 : vector<4x32x128xi1>, vector<4x32x128xf32>
    %cst_12 = arith.constant 1.000000e+00 : f32
    %31 = vector.broadcast %cst_12 : f32 to vector<4x32x128xf32>
    %32 = arith.addf %28, %31 : vector<4x32x128xf32>
    %33 = arith.select %21, %32, %28 : vector<4x32x128xi1>, vector<4x32x128xf32>
    %c0_13 = arith.constant 0 : index
    %c0_14 = arith.constant 0 : index
    %c0_15 = arith.constant 0 : index
    %34 = vector.load %arg6[%c0_13, %c0_14, %c0_15] : memref<4x8x128xf32, #tpu.memory_space<vmem>>, vector<4x8x128xf32>
    %35 = vector.shape_cast %30 : vector<4x32x128xf32> to vector<4x4x8x128xf32>
    %cst_16 = arith.constant dense<0.000000e+00> : vector<4x8x128xf32>
    %36 = vector.multi_reduction <add>, %35, %cst_16 [1] : vector<4x4x8x128xf32> to vector<4x8x128xf32>
    %37 = arith.addf %34, %36 : vector<4x8x128xf32>
    %c0_17 = arith.constant 0 : index
    %c0_18 = arith.constant 0 : index
    %c0_19 = arith.constant 0 : index
    %38 = vector.load %arg6[%c0_17, %c0_18, %c0_19] : memref<4x8x128xf32, #tpu.memory_space<vmem>>, vector<4x8x128xf32>
    tpu.vector_store %arg6[%c0_17, %c0_18, %c0_19], %37 {strides = array<i32>} : memref<4x8x128xf32, #tpu.memory_space<vmem>>, vector<4x8x128xf32>,
    %c0_20 = arith.constant 0 : index
    %c0_21 = arith.constant 0 : index
    %c0_22 = arith.constant 0 : index
    %39 = vector.load %arg7[%c0_20, %c0_21, %c0_22] : memref<4x8x128xf32, #tpu.memory_space<vmem>>, vector<4x8x128xf32>
    %40 = vector.shape_cast %33 : vector<4x32x128xf32> to vector<4x4x8x128xf32>
    %cst_23 = arith.constant dense<0.000000e+00> : vector<4x8x128xf32>
    %41 = vector.multi_reduction <add>, %40, %cst_23 [1] : vector<4x4x8x128xf32> to vector<4x8x128xf32>
    %42 = arith.addf %39, %41 : vector<4x8x128xf32>
    %c0_24 = arith.constant 0 : index
    %c0_25 = arith.constant 0 : index
    %c0_26 = arith.constant 0 : index
    %43 = vector.load %arg7[%c0_24, %c0_25, %c0_26] : memref<4x8x128xf32, #tpu.memory_space<vmem>>, vector<4x8x128xf32>
    tpu.vector_store %arg7[%c0_24, %c0_25, %c0_26], %42 {strides = array<i32>} : memref<4x8x128xf32, #tpu.memory_space<vmem>>, vector<4x8x128xf32>,
    %c0_i32_27 = arith.constant 0 : i32
    %44 = arith.cmpi eq, %arg2, %c0_i32_27 : i32
    %45 = arith.extui %44 : i1 to i32
    %c0_i32_28 = arith.constant 0 : i32
    %46 = arith.cmpi ne, %45, %c0_i32_28 : i32
    scf.if %46 {
      %c0_29 = arith.constant 0 : index
      %c0_30 = arith.constant 0 : index
      %c0_31 = arith.constant 0 : index
      %47 = vector.load %arg6[%c0_29, %c0_30, %c0_31] : memref<4x8x128xf32, #tpu.memory_space<vmem>>, vector<4x8x128xf32>
      %cst_32 = arith.constant dense<0.000000e+00> : vector<4x8xf32>
      %48 = vector.multi_reduction <add>, %47, %cst_32 [2] : vector<4x8x128xf32> to vector<4x8xf32>
      %cst_33 = arith.constant dense<0.000000e+00> : vector<4xf32>
      %49 = vector.multi_reduction <add>, %48, %cst_33 [1] : vector<4x8xf32> to vector<4xf32>
      %c0_34 = arith.constant 0 : index
      %c0_35 = arith.constant 0 : index
      %c0_36 = arith.constant 0 : index
      %50 = vector.load %arg7[%c0_34, %c0_35, %c0_36] : memref<4x8x128xf32, #tpu.memory_space<vmem>>, vector<4x8x128xf32>
      %cst_37 = arith.constant dense<0.000000e+00> : vector<4x8xf32>
      %51 = vector.multi_reduction <add>, %50, %cst_37 [2] : vector<4x8x128xf32> to vector<4x8xf32>
      %cst_38 = arith.constant dense<0.000000e+00> : vector<4xf32>
      %52 = vector.multi_reduction <add>, %51, %cst_38 [1] : vector<4x8xf32> to vector<4xf32>
      %c0_39 = arith.constant 0 : index
      %c0_40 = arith.constant 0 : index
      %c0_41 = arith.constant 0 : index
      %c0_42 = arith.constant 0 : index
      %53 = vector.load %arg5[%c0_39, %c0_40, %c0_41, %c0_42] : memref<1x1x2x4xf32, #tpu.memory_space<vmem>>, vector<1x1x1x4xf32>
      %54 = vector.shape_cast %53 : vector<1x1x1x4xf32> to vector<4xf32>
      %55 = vector.shape_cast %49 : vector<4xf32> to vector<1x1x1x4xf32>
      tpu.vector_store %arg5[%c0_39, %c0_40, %c0_41, %c0_42], %55 {strides = array<i32>} : memref<1x1x2x4xf32, #tpu.memory_space<vmem>>, vector<1x1x1x4xf32>,
      %c0_43 = arith.constant 0 : index
      %c0_44 = arith.constant 0 : index
      %c1 = arith.constant 1 : index
      %c0_45 = arith.constant 0 : index
      %56 = vector.load %arg5[%c0_43, %c0_44, %c1, %c0_45] : memref<1x1x2x4xf32, #tpu.memory_space<vmem>>, vector<1x1x1x4xf32>
      %57 = vector.shape_cast %56 : vector<1x1x1x4xf32> to vector<4xf32>
      %58 = vector.shape_cast %52 : vector<4xf32> to vector<1x1x1x4xf32>
      tpu.vector_store %arg5[%c0_43, %c0_44, %c1, %c0_45], %58 {strides = array<i32>} : memref<1x1x2x4xf32, #tpu.memory_space<vmem>>, vector<1x1x1x4xf32>,
    } else {
    }
    return
  }
  func.func @transform_0(%arg0: i32, %arg1: i32, %arg2: i32) -> (i32, i32, i32, i32) {
    %c1_i32 = arith.constant 1 : i32
    %0 = arith.muli %arg1, %c1_i32 : i32
    %1 = arith.addi %0, %arg2 : i32
    %c0_i32 = arith.constant 0 : i32
    %c0_i32_0 = arith.constant 0 : i32
    %c0_i32_1 = arith.constant 0 : i32
    return %arg0, %c0_i32, %1, %c0_i32_0 : i32, i32, i32, i32
  }
  func.func @transform_1(%arg0: i32, %arg1: i32, %arg2: i32) -> (i32, i32, i32, i32) {
    %c1_i32 = arith.constant 1 : i32
    %0 = arith.muli %arg1, %c1_i32 : i32
    %1 = arith.addi %0, %arg2 : i32
    %c0_i32 = arith.constant 0 : i32
    %c0_i32_0 = arith.constant 0 : i32
    %c0_i32_1 = arith.constant 0 : i32
    return %arg0, %c0_i32, %1, %c0_i32_0 : i32, i32, i32, i32
  }
  func.func @transform_2(%arg0: i32, %arg1: i32, %arg2: i32) -> (i32, i32, i32, i32) {
    %c0_i32 = arith.constant 0 : i32
    %c0_i32_0 = arith.constant 0 : i32
    %c0_i32_1 = arith.constant 0 : i32
    return %arg0, %arg1, %c0_i32, %c0_i32_0 : i32, i32, i32, i32
  }
}

</mosaic_0001>

<llo_original>
// kernel: tpu_custom_call.1
$region0: #{tpu_custom_call.1}
  #allocation0 [shape = 'u32[]', space=smem, size = 0x4, offset = 0x4, fixed_abs, tag = 'smem constant byte address 0x4 - core index']
  #allocation1 [shape = 'u32[144,128]{1,0:T(1,128)}', space=vmem, size = 0x12000, scoped, tag = 'internal scratch']
  #allocation2 [shape = 'f32[4,8,128]{2,1,0:T(8,128)}', space=vmem, size = 0x4000, scoped, tag = 'scratch operand']
  #allocation3 [shape = 'f32[4,8,128]{2,1,0:T(8,128)}', space=vmem, size = 0x4000, scoped, tag = 'scratch operand']
  %s0 = inlined_call_operand.hbm [shape: f32[2,4,32,128], index: 0, kind: input, shape index: {}]
  %s1 = inlined_call_operand.hbm [shape: s8[2,1,32,128], index: 1, kind: input, shape index: {}]
  %s2 = inlined_call_operand.hbm [shape: f32[2,1,2,4], index: 2, kind: output, shape index: {}]
  %s3 = sld [smem:[#allocation0]]
  $region57: #{tpu_custom_call.1} parent=0
    _
  %s5 = ssub.s32 1, %s3
  %s6 = scalar_select 0, %s5, %s3
  $region1: #{tpu_custom_call.1} parent=0
    #allocation4 [shape = 'u8[131072]{0}', space=vmem, size = 0x20000, scoped, tag = 'input window, operand 0']
    #allocation5 [shape = 's32[2]{0}', space=sflag, size = 0x8, scoped, tag = 'scoped memory for tpu_custom_call.1']
    #allocation6 [shape = 's32[2]{0}', space=sflag, size = 0x8, scoped, tag = 'scoped memory for tpu_custom_call.1']
    #allocation7 [shape = 'u8[8192]{0}', space=vmem, size = 0x2000, scoped, tag = 'input window, operand 1']
    #allocation8 [shape = 's32[2]{0}', space=sflag, size = 0x8, scoped, tag = 'scoped memory for tpu_custom_call.1']
    #allocation9 [shape = 'u8[2048]{0}', space=vmem, size = 0x800, scoped, tag = 'output window, operand 0']
    %7 = vsyncpa [#allocation5], 0
    %s8 = scalar_lea.sflag [#allocation5], 1
    %9 = vsyncpa %s8, 0
    %10 = vsyncpa [#allocation8], 0
    %s11 = scalar_lea.sflag [#allocation8], 1
    %12 = vsyncpa %s11, 0
    %13 = vsyncpa [#allocation6], 0
    %s14 = scalar_lea.sflag [#allocation6], 1
    %15 = vsyncpa %s14, 0
    loop: start=0, step=1, limit=4
    $region2: #{tpu_custom_call.1} parent=1 // loop_pre_header
      _
    $region3: #{tpu_custom_call.1} parent=1 // loop_header
      %s17 = sphi 0, %s21
      %p18 = scmp.ge.s32.totalorder %s17, 4
      %s24 = sphi 0, %s43
      %s25 = sphi 0, %s39
      %s26 = sphi 0, %s35
      %s27 = sphi 0, %s24
      %s28 = sphi 0, %s25
      %s29 = sphi 0, %s26
      %s30 = sphi 0, %s27
      %s31 = sphi 0, %s28
      %s32 = sphi 0, %s29
      %s50 = sphi 0, %s52
      %s53 = sphi 0, %s50
      %s54 = sphi 0, %s53
      %s70 = sphi 0, %s54
      %s80 = sphi 0, %s82
      %s83 = sphi 0, %s80
      %s84 = sphi 0, %s83
      %s100 = sphi 0, %s84
      %s108 = sphi 0, %s110
      %s111 = sphi 0, %s108
      %s112 = sphi 0, %s111
      %s128 = sphi 0, %s112
    $region4: #{tpu_custom_call.1} parent=1 // loop_header_branch
      %20 = sbr.rel (%p18) target = $region8
    $region5: #{tpu_custom_call.1} parent=1 // loop_body
      %s22 = ssub.s32 %s17, 1
      %s23 = ssub.s32 %s17, 2
      %s33 = sadd.s32 1, %s26
      %p34 = scmp.ge.s32.totalorder %s33, 1
      %s35 = scalar_select %p34, 0, %s33
      %s36 = sadd.s32 1, %s25
      %s37 = scalar_select %p34, %s36, %s25
      %p38 = scmp.ge.s32.totalorder %s37, 1
      %s39 = scalar_select %p38, 0, %s37
      %s40 = sadd.s32 1, %s24
      %s41 = scalar_select %p38, %s40, %s24
      %p42 = scmp.ge.s32.totalorder %s41, 2
      %s43 = scalar_select %p42, 0, %s41
      %s44 = sadd.s32 %s25, %s26
      %s45 = sadd.s32 %s39, %s35
      %s46 = ssub.s32 %s24, %s43
      %s47 = ssub.s32 %s44, %s45
      %s48 = sor.u32 %s46, %s47
      %p49 = scmp.eq.s32.totalorder %s48, 0
      %s51 = sadd.s32 %s50, 1
      %s52 = scalar_select %p49, %s50, %s51
      %p55 = pneg %p49
      %p56 = scmp.eq.s32.totalorder %s17, 1
      %p57 = por %p55, %p56
      %p58 = scmp.ne.s32.totalorder %s50, %s53
      %p59 = scmp.eq.s32.totalorder %s17, 0
      %p60 = por %p58, %p59
      %p61 = scmp.ne.s32.totalorder %s50, %s53
      %p62 = scmp.eq.s32.totalorder %s22, 1
      %p63 = por %p61, %p62
      %p64 = scmp.ne.s32.totalorder %s53, %s54
      %p65 = scmp.eq.s32.totalorder %s22, 0
      %p66 = por %p64, %p65
      %p67 = scmp.ne.s32.totalorder %s53, %s54
      %p68 = scmp.eq.s32.totalorder %s23, 1
      %p69 = por %p67, %p68
      %p71 = scmp.ne.s32.totalorder %s54, %s70
      %p72 = scmp.eq.s32.totalorder %s23, 0
      %p73 = por %p71, %p72
      %s74 = sadd.s32 %s25, %s26
      %s75 = sadd.s32 %s39, %s35
      %s76 = ssub.s32 %s24, %s43
      %s77 = ssub.s32 %s74, %s75
      %s78 = sor.u32 %s76, %s77
      %p79 = scmp.eq.s32.totalorder %s78, 0
      %s81 = sadd.s32 %s80, 1
      %s82 = scalar_select %p79, %s80, %s81
      %p85 = pneg %p79
      %p86 = scmp.eq.s32.totalorder %s17, 1
      %p87 = por %p85, %p86
      %p88 = scmp.ne.s32.totalorder %s80, %s83
      %p89 = scmp.eq.s32.totalorder %s17, 0
      %p90 = por %p88, %p89
      %p91 = scmp.ne.s32.totalorder %s80, %s83
      %p92 = scmp.eq.s32.totalorder %s22, 1
      %p93 = por %p91, %p92
      %p94 = scmp.ne.s32.totalorder %s83, %s84
      %p95 = scmp.eq.s32.totalorder %s22, 0
      %p96 = por %p94, %p95
      %p97 = scmp.ne.s32.totalorder %s83, %s84
      %p98 = scmp.eq.s32.totalorder %s23, 1
      %p99 = por %p97, %p98
      %p101 = scmp.ne.s32.totalorder %s84, %s100
      %p102 = scmp.eq.s32.totalorder %s23, 0
      %p103 = por %p101, %p102
      %s104 = ssub.s32 %s24, %s43
      %s105 = ssub.s32 %s25, %s39
      %s106 = sor.u32 %s104, %s105
      %p107 = scmp.eq.s32.totalorder %s106, 0
      %s109 = sadd.s32 %s108, 1
      %s110 = scalar_select %p107, %s108, %s109
      %p113 = pneg %p107
      %p114 = scmp.eq.s32.totalorder %s17, 1
      %p115 = por %p113, %p114
      %p116 = scmp.ne.s32.totalorder %s108, %s111
      %p117 = scmp.eq.s32.totalorder %s17, 0
      %p118 = por %p116, %p117
      %p119 = scmp.ne.s32.totalorder %s108, %s111
      %p120 = scmp.eq.s32.totalorder %s22, 1
      %p121 = por %p119, %p120
      %p122 = scmp.ne.s32.totalorder %s111, %s112
      %p123 = scmp.eq.s32.totalorder %s22, 0
      %p124 = por %p122, %p123
      %p125 = scmp.ne.s32.totalorder %s111, %s112
      %p126 = scmp.eq.s32.totalorder %s23, 1
      %p127 = por %p125, %p126
      %p129 = scmp.ne.s32.totalorder %s112, %s128
      %p130 = scmp.eq.s32.totalorder %s23, 0
      %p131 = por %p129, %p130
      %p132 = scmp.le.s32.totalorder 1, %s17
      %p133 = scmp.lt.s32.totalorder %s17, 3
      %p134 = pnand %p132, %p133
      %p135 = pneg %p134
      // Predicated region
      $region9: #{tpu_custom_call.1} parent=5 // pred_check
        _
      $region10: #{tpu_custom_call.1} parent=5 // pred_check_branch
        %137 = sbr.rel (%p134) target = $region12
      $region11: #{tpu_custom_call.1} parent=5 // pred_region
        %s138 = ssub.s32 %s17, 1
      $region12: #{tpu_custom_call.1} parent=5 // pred_fallthru
        _
      %p139 = scmp.lt.s32.totalorder %s17, 2
      // Predicated region
      $region13: #{tpu_custom_call.1} parent=5 // pred_check
        %p140 = pneg %p139
      $region14: #{tpu_custom_call.1} parent=5 // pred_check_branch
        %142 = sbr.rel (%p140) target = $region16
      $region15: #{tpu_custom_call.1} parent=5 // pred_region
        // Predicated region
        $region17: #{tpu_custom_call.1} parent=15 // pred_check
          %p143 = pneg %p60
        $region18: #{tpu_custom_call.1} parent=15 // pred_check_branch
          %145 = sbr.rel (%p143) target = $region20
        $region19: #{tpu_custom_call.1} parent=15 // pred_region
          %s146 = sand.u32 %s50, 1
          %s147 = scalar_lea.sflag [#allocation5], %s146
          %s148 = sand.u32 %s50, 1
          %s149 = smul.addr %s148, 128
          %s150 = scalar_lea.vmem [#allocation4], %s149
          %s151 = sadd.s32 %s25, %s26
          %s152 = smul.u32 4, %s151
          %s154 = ssub.s32 2048, 2048
          %155 = vsyncadd %s147, %s154
          %s156 = smul.addr %s24, 16
          %s157 = sadd.s32 %s152, %s156
          %s158 = smul.addr %s157, 128
          %s159 = scalar_lea.hbm %s0, %s158
          %s160 = sshll.u32 %s150, 4
          %s161 = int_to_ptr.vmem [resolvable:$true] %s160
          %166 = dma.hbm_to_vmem [thread:$0]  %s159, 2048, %s161, %s147, 128, 128, 8
        $region20: #{tpu_custom_call.1} parent=15 // pred_fallthru
          _
        // Predicated region
        $region21: #{tpu_custom_call.1} parent=15 // pred_check
          %p167 = pneg %p90
        $region22: #{tpu_custom_call.1} parent=15 // pred_check_branch
          %169 = sbr.rel (%p167) target = $region24
        $region23: #{tpu_custom_call.1} parent=15 // pred_region
          %s170 = sand.u32 %s80, 1
          %s171 = scalar_lea.sflag [#allocation8], %s170
          %s172 = sand.u32 %s80, 1
          %s173 = smul.addr %s172, 8
          %s174 = scalar_lea.vmem [#allocation7], %s173
          %s175 = sadd.s32 %s25, %s26
          %s177 = ssub.s32 128, 128
          %178 = vsyncadd %s171, %s177
          %s179 = sadd.s32 %s175, %s24
          %s180 = smul.addr %s179, 128
          %s181 = scalar_lea.hbm %s1, %s180
          %s183 = sshll.u32 %s174, 4
          %s184 = int_to_ptr.vmem [resolvable:$true] %s183
          %186 = dma.hbm_to_vmem [thread:$0]  %s181, 128, %s184, %s171
        $region24: #{tpu_custom_call.1} parent=15 // pred_fallthru
          _
      $region16: #{tpu_custom_call.1} parent=5 // pred_fallthru
        _
      %p187 = scmp.le.s32.totalorder 1, %s17
      %p188 = scmp.lt.s32.totalorder %s17, 3
      %p189 = pnand %p187, %p188
      %p190 = pneg %p189
      // Predicated region
      $region25: #{tpu_custom_call.1} parent=5 // pred_check
        _
      $region26: #{tpu_custom_call.1} parent=5 // pred_check_branch
        %192 = sbr.rel (%p189) target = $region28
      $region27: #{tpu_custom_call.1} parent=5 // pred_region
        %s193 = ssub.s32 %s17, 1
        %s194 = sand.u32 %s53, 1
        %s195 = scalar_lea.sflag [#allocation5], %s194
        %s196 = sand.u32 %s53, 1
        %s197 = smul.addr %s196, 128
        %s198 = scalar_lea.vmem [#allocation4], %s197
        // Predicated region
        $region29: #{tpu_custom_call.1} parent=27 // pred_check
          %p199 = pneg %p66
        $region30: #{tpu_custom_call.1} parent=27 // pred_check_branch
          %201 = sbr.rel (%p199) target = $region32
        $region31: #{tpu_custom_call.1} parent=27 // pred_region
          %202 = dma.done %s195, 2048
        $region32: #{tpu_custom_call.1} parent=27 // pred_fallthru
          _
        %s203 = sand.u32 %s83, 1
        %s204 = scalar_lea.sflag [#allocation8], %s203
        %s205 = sand.u32 %s83, 1
        %s206 = smul.addr %s205, 8
        %s207 = scalar_lea.vmem [#allocation7], %s206
        // Predicated region
        $region33: #{tpu_custom_call.1} parent=27 // pred_check
          %p208 = pneg %p96
        $region34: #{tpu_custom_call.1} parent=27 // pred_check_branch
          %210 = sbr.rel (%p208) target = $region36
        $region35: #{tpu_custom_call.1} parent=27 // pred_region
          %211 = dma.done %s204, 128
        $region36: #{tpu_custom_call.1} parent=27 // pred_fallthru
          _
        %s212 = sand.u32 %s53, 1
        %s213 = scalar_lea.sflag [#allocation5], %s212
        %s214 = sand.u32 %s53, 1
        %s215 = smul.addr %s214, 128
        %s216 = scalar_lea.vmem [#allocation4], %s215
        %p217 = pneg %p66
        %p218 = pneg %p63
        %s219 = sand.u32 %s83, 1
        %s220 = scalar_lea.sflag [#allocation8], %s219
        %s221 = sand.u32 %s83, 1
        %s222 = smul.addr %s221, 8
        %s223 = scalar_lea.vmem [#allocation7], %s222
        %p224 = pneg %p96
        %p225 = pneg %p93
        %p226 = pneg %p124
        %p227 = pneg %p121
        %s228 = sand.u32 %s111, 1
        %s229 = scalar_lea.sflag [#allocation6], %s228
        %s230 = sand.u32 %s111, 1
        %s231 = smul.addr %s230, 2
        %s232 = scalar_lea.vmem [#allocation9], %s231
        %s233 = sadd.s32 %s28, %s29
        %s234 = smul.u32 4, %s233
        %s235 = sadd.s32 %s28, %s29
        %p236 = scmp.eq.s32.totalorder %s29, 0
        // Predicated region
        $region37: #{tpu_custom_call.1} parent=27 // pred_check
          %p237 = pneg %p236
        $region38: #{tpu_custom_call.1} parent=27 // pred_check_branch
          %239 = sbr.rel (%p237) target = $region40
        $region39: #{tpu_custom_call.1} parent=27 // pred_region
          %240 = vst [vmem:[#allocation2] sm:$0xff] 0.0
          %241 = vst [vmem:[#allocation2 + $0x8] sm:$0xff] 0.0
          %242 = vst [vmem:[#allocation2 + $0x10] sm:$0xff] 0.0
          %243 = vst [vmem:[#allocation2 + $0x18] sm:$0xff] 0.0
          %244 = vst [vmem:[#allocation3] sm:$0xff] 0.0
          %245 = vst [vmem:[#allocation3 + $0x8] sm:$0xff] 0.0
          %246 = vst [vmem:[#allocation3 + $0x10] sm:$0xff] 0.0
          %247 = vst [vmem:[#allocation3 + $0x18] sm:$0xff] 0.0
        $region40: #{tpu_custom_call.1} parent=27 // pred_fallthru
          _
        %v248 = vld [vmem:[%s198] sm:$0xff]
        %v249 = vld [vmem:[%s198 + $0x8] sm:$0xff]
        %v250 = vld [vmem:[%s198 + $0x10] sm:$0xff]
        %v251 = vld [vmem:[%s198 + $0x18] sm:$0xff]
        %v252 = vld [vmem:[%s198 + $0x20] sm:$0xff]
        %v253 = vld [vmem:[%s198 + $0x28] sm:$0xff]
        %v254 = vld [vmem:[%s198 + $0x30] sm:$0xff]
        %v255 = vld [vmem:[%s198 + $0x38] sm:$0xff]
        %v256 = vld [vmem:[%s198 + $0x40] sm:$0xff]
        %v257 = vld [vmem:[%s198 + $0x48] sm:$0xff]
        %v258 = vld [vmem:[%s198 + $0x50] sm:$0xff]
        %v259 = vld [vmem:[%s198 + $0x58] sm:$0xff]
        %v260 = vld [vmem:[%s198 + $0x60] sm:$0xff]
        %v261 = vld [vmem:[%s198 + $0x68] sm:$0xff]
        %v262 = vld [vmem:[%s198 + $0x70] sm:$0xff]
        %v263 = vld [vmem:[%s198 + $0x78] sm:$0xff]
        %v264 = vld [vmem:[%s207] sm:$0xff]
        %v265 = vunpack.c.0.s8 %v264
        %v266 = vunpack.c.1.s8 %v264
        %v267 = vunpack.c.2.s8 %v264
        %v268 = vunpack.c.3.s8 %v264
        %v269 = vmax.f32 %v248, %v252
        %v270 = vmax.f32 %v269, %v256
        %v271 = vmax.f32 %v270, %v260
        %v272 = vmax.f32 %v249, %v253
        %v273 = vmax.f32 %v272, %v257
        %v274 = vmax.f32 %v273, %v261
        %v275 = vmax.f32 %v250, %v254
        %v276 = vmax.f32 %v275, %v258
        %v277 = vmax.f32 %v276, %v262
        %v278 = vmax.f32 %v251, %v255
        %v279 = vmax.f32 %v278, %v259
        %v280 = vmax.f32 %v279, %v263
        %v281 = vsub.f32 %v248, %v271
        %v282 = vsub.f32 %v249, %v274
        %v283 = vsub.f32 %v250, %v277
        %v284 = vsub.f32 %v251, %v280
        %v285 = vsub.f32 %v252, %v271
        %v286 = vsub.f32 %v253, %v274
        %v287 = vsub.f32 %v254, %v277
        %v288 = vsub.f32 %v255, %v280
        %v289 = vsub.f32 %v256, %v271
        %v290 = vsub.f32 %v257, %v274
        %v291 = vsub.f32 %v258, %v277
        %v292 = vsub.f32 %v259, %v280
        %v293 = vsub.f32 %v260, %v271
        %v294 = vsub.f32 %v261, %v274
        %v295 = vsub.f32 %v262, %v277
        %v296 = vsub.f32 %v263, %v280
        %v297 = vmul.f32 %v281, 1.442695
        %v298 = vpow.pop %v297
        %v299 = vmul.f32 %v282, 1.442695
        %v300 = vpow.pop %v299
        %v301 = vmul.f32 %v283, 1.442695
        %v302 = vpow.pop %v301
        %v303 = vmul.f32 %v284, 1.442695
        %v304 = vpow.pop %v303
        %v305 = vmul.f32 %v285, 1.442695
        %v306 = vpow.pop %v305
        %v307 = vmul.f32 %v286, 1.442695
        %v308 = vpow.pop %v307
        %v309 = vmul.f32 %v287, 1.442695
        %v310 = vpow.pop %v309
        %v311 = vmul.f32 %v288, 1.442695
        %v312 = vpow.pop %v311
        %v313 = vmul.f32 %v289, 1.442695
        %v314 = vpow.pop %v313
        %v315 = vmul.f32 %v290, 1.442695
        %v316 = vpow.pop %v315
        %v317 = vmul.f32 %v291, 1.442695
        %v318 = vpow.pop %v317
        %v319 = vmul.f32 %v292, 1.442695
        %v320 = vpow.pop %v319
        %v321 = vmul.f32 %v293, 1.442695
        %v322 = vpow.pop %v321
        %v323 = vmul.f32 %v294, 1.442695
        %v324 = vpow.pop %v323
        %v325 = vmul.f32 %v295, 1.442695
        %v326 = vpow.pop %v325
        %v327 = vmul.f32 %v296, 1.442695
        %v328 = vpow.pop %v327
        %v329 = vadd.f32 %v298, %v306
        %v330 = vadd.f32 %v329, %v314
        %v331 = vadd.f32 %v330, %v322
        %v332 = vadd.f32 %v300, %v308
        %v333 = vadd.f32 %v332, %v316
        %v334 = vadd.f32 %v333, %v324
        %v335 = vadd.f32 %v302, %v310
        %v336 = vadd.f32 %v335, %v318
        %v337 = vadd.f32 %v336, %v326
        %v338 = vadd.f32 %v304, %v312
        %v339 = vadd.f32 %v338, %v320
        %v340 = vadd.f32 %v339, %v328
        %v341 = vrcp.pop %v331
        %v342 = vrcp.pop %v334
        %v343 = vrcp.pop %v337
        %v344 = vrcp.pop %v340
        %v345 = vmul.f32 %v298, %v341
        %v346 = vmul.f32 %v300, %v342
        %v347 = vmul.f32 %v302, %v343
        %v348 = vmul.f32 %v304, %v344
        %v349 = vmul.f32 %v306, %v341
        %v350 = vmul.f32 %v308, %v342
        %v351 = vmul.f32 %v310, %v343
        %v352 = vmul.f32 %v312, %v344
        %v353 = vmul.f32 %v314, %v341
        %v354 = vmul.f32 %v316, %v342
        %v355 = vmul.f32 %v318, %v343
        %v356 = vmul.f32 %v320, %v344
        %v357 = vmul.f32 %v322, %v341
        %v358 = vmul.f32 %v324, %v342
        %v359 = vmul.f32 %v326, %v343
        %v360 = vmul.f32 %v328, %v344
        %vm361 = vcmp.eq.s32.totalorder %v265, 0
        %vm362 = vcmp.eq.s32.totalorder %v266, 0
        %vm363 = vcmp.eq.s32.totalorder %v267, 0
        %vm364 = vcmp.eq.s32.totalorder %v268, 0
        %vm365 = vcmp.eq.s32.totalorder %v265, 1
        %vm366 = vcmp.eq.s32.totalorder %v266, 1
        %vm367 = vcmp.eq.s32.totalorder %v267, 1
        %vm368 = vcmp.eq.s32.totalorder %v268, 1
        %vm369 = vcmp.eq.s32.totalorder %v265, 2
        %vm370 = vcmp.eq.s32.totalorder %v266, 2
        %vm371 = vcmp.eq.s32.totalorder %v267, 2
        %vm372 = vcmp.eq.s32.totalorder %v268, 2
        %vm373 = vcmp.eq.s32.totalorder %v265, 3
        %vm374 = vcmp.eq.s32.totalorder %v266, 3
        %vm375 = vcmp.eq.s32.totalorder %v267, 3
        %vm376 = vcmp.eq.s32.totalorder %v268, 3
        %vm377 = vcmp.ge.s32.totalorder %v265, 0
        %vm378 = vcmp.ge.s32.totalorder %v266, 0
        %vm379 = vcmp.ge.s32.totalorder %v267, 0
        %vm380 = vcmp.ge.s32.totalorder %v268, 0
        %v381 = vsel %vm377, 1, 0
        %v382 = vsel %vm378, 1, 0
        %v383 = vsel %vm379, 1, 0
        %v384 = vsel %vm380, 1, 0
        %vm385 = vcmp.eq.s32.totalorder %v381, 1
        %vm386 = vcmp.eq.s32.totalorder %v382, 1
        %vm387 = vcmp.eq.s32.totalorder %v383, 1
        %vm388 = vcmp.eq.s32.totalorder %v384, 1
        %v389 = vsel %vm385, %v345, 0.0
        %v390 = vsel %vm386, %v346, 0.0
        %v391 = vsel %vm387, %v347, 0.0
        %v392 = vsel %vm388, %v348, 0.0
        %v393 = vsel %vm385, %v349, 0.0
        %v394 = vsel %vm386, %v350, 0.0
        %v395 = vsel %vm387, %v351, 0.0
        %v396 = vsel %vm388, %v352, 0.0
        %v397 = vsel %vm385, %v353, 0.0
        %v398 = vsel %vm386, %v354, 0.0
        %v399 = vsel %vm387, %v355, 0.0
        %v400 = vsel %vm388, %v356, 0.0
        %v401 = vsel %vm385, %v357, 0.0
        %v402 = vsel %vm386, %v358, 0.0
        %v403 = vsel %vm387, %v359, 0.0
        %v404 = vsel %vm388, %v360, 0.0
        %v405 = vsel %vm361, %v345, 0.0
        %v406 = vsel %vm362, %v346, 0.0
        %v407 = vsel %vm363, %v347, 0.0
        %v408 = vsel %vm364, %v348, 0.0
        %v409 = vsel %vm365, %v349, 0.0
        %v410 = vsel %vm366, %v350, 0.0
        %v411 = vsel %vm367, %v351, 0.0
        %v412 = vsel %vm368, %v352, 0.0
        %v413 = vsel %vm369, %v353, 0.0
        %v414 = vsel %vm370, %v354, 0.0
        %v415 = vsel %vm371, %v355, 0.0
        %v416 = vsel %vm372, %v356, 0.0
        %v417 = vsel %vm373, %v357, 0.0
        %v418 = vsel %vm374, %v358, 0.0
        %v419 = vsel %vm375, %v359, 0.0
        %v420 = vsel %vm376, %v360, 0.0
        %v421 = vadd.f32 %v389, 1.0
        %v422 = vadd.f32 %v390, 1.0
        %v423 = vadd.f32 %v391, 1.0
        %v424 = vadd.f32 %v392, 1.0
        %v425 = vadd.f32 %v393, 1.0
        %v426 = vadd.f32 %v394, 1.0
        %v427 = vadd.f32 %v395, 1.0
        %v428 = vadd.f32 %v396, 1.0
        %v429 = vadd.f32 %v397, 1.0
        %v430 = vadd.f32 %v398, 1.0
        %v431 = vadd.f32 %v399, 1.0
        %v432 = vadd.f32 %v400, 1.0
        %v433 = vadd.f32 %v401, 1.0
        %v434 = vadd.f32 %v402, 1.0
        %v435 = vadd.f32 %v403, 1.0
        %v436 = vadd.f32 %v404, 1.0
        %v437 = vsel %vm361, %v421, %v389
        %v438 = vsel %vm362, %v422, %v390
        %v439 = vsel %vm363, %v423, %v391
        %v440 = vsel %vm364, %v424, %v392
        %v441 = vsel %vm365, %v425, %v393
        %v442 = vsel %vm366, %v426, %v394
        %v443 = vsel %vm367, %v427, %v395
        %v444 = vsel %vm368, %v428, %v396
        %v445 = vsel %vm369, %v429, %v397
        %v446 = vsel %vm370, %v430, %v398
        %v447 = vsel %vm371, %v431, %v399
        %v448 = vsel %vm372, %v432, %v400
        %v449 = vsel %vm373, %v433, %v401
        %v450 = vsel %vm374, %v434, %v402
        %v451 = vsel %vm375, %v435, %v403
        %v452 = vsel %vm376, %v436, %v404
        %v453 = vld [vmem:[#allocation2] sm:$0xff]
        %v454 = vld [vmem:[#allocation2 + $0x8] sm:$0xff]
        %v455 = vld [vmem:[#allocation2 + $0x10] sm:$0xff]
        %v456 = vld [vmem:[#allocation2 + $0x18] sm:$0xff]
        %v457 = vadd.f32 %v405, %v406
        %v458 = vadd.f32 %v457, %v407
        %v459 = vadd.f32 %v458, %v408
        %v460 = vadd.f32 %v409, %v410
        %v461 = vadd.f32 %v460, %v411
        %v462 = vadd.f32 %v461, %v412
        %v463 = vadd.f32 %v413, %v414
        %v464 = vadd.f32 %v463, %v415
        %v465 = vadd.f32 %v464, %v416
        %v466 = vadd.f32 %v417, %v418
        %v467 = vadd.f32 %v466, %v419
        %v468 = vadd.f32 %v467, %v420
        %v469 = vadd.f32 %v453, %v459
        %v470 = vadd.f32 %v454, %v462
        %v471 = vadd.f32 %v455, %v465
        %v472 = vadd.f32 %v456, %v468
        %473 = vst [vmem:[#allocation2] sm:$0xff] %v469
        %474 = vst [vmem:[#allocation2 + $0x8] sm:$0xff] %v470
        %475 = vst [vmem:[#allocation2 + $0x10] sm:$0xff] %v471
        %476 = vst [vmem:[#allocation2 + $0x18] sm:$0xff] %v472
        %v477 = vld [vmem:[#allocation3] sm:$0xff]
        %v478 = vld [vmem:[#allocation3 + $0x8] sm:$0xff]
        %v479 = vld [vmem:[#allocation3 + $0x10] sm:$0xff]
        %v480 = vld [vmem:[#allocation3 + $0x18] sm:$0xff]
        %v481 = vadd.f32 %v437, %v438
        %v482 = vadd.f32 %v481, %v439
        %v483 = vadd.f32 %v482, %v440
        %v484 = vadd.f32 %v441, %v442
        %v485 = vadd.f32 %v484, %v443
        %v486 = vadd.f32 %v485, %v444
        %v487 = vadd.f32 %v445, %v446
        %v488 = vadd.f32 %v487, %v447
        %v489 = vadd.f32 %v488, %v448
        %v490 = vadd.f32 %v449, %v450
        %v491 = vadd.f32 %v490, %v451
        %v492 = vadd.f32 %v491, %v452
        %v493 = vadd.f32 %v477, %v483
        %v494 = vadd.f32 %v478, %v486
        %v495 = vadd.f32 %v479, %v489
        %v496 = vadd.f32 %v480, %v492
        %497 = vst [vmem:[#allocation3] sm:$0xff] %v493
        %498 = vst [vmem:[#allocation3 + $0x8] sm:$0xff] %v494
        %499 = vst [vmem:[#allocation3 + $0x10] sm:$0xff] %v495
        %500 = vst [vmem:[#allocation3 + $0x18] sm:$0xff] %v496
        // Predicated region
        $region41: #{tpu_custom_call.1} parent=27 // pred_check
          %p501 = pneg %p236
        $region42: #{tpu_custom_call.1} parent=27 // pred_check_branch
          %503 = sbr.rel (%p501) target = $region44
        $region43: #{tpu_custom_call.1} parent=27 // pred_region
          %v504 = vld [vmem:[#allocation2] sm:$0xff]
          %v505 = vld [vmem:[#allocation2 + $0x8] sm:$0xff]
          %v506 = vld [vmem:[#allocation2 + $0x10] sm:$0xff]
          %v507 = vld [vmem:[#allocation2 + $0x18] sm:$0xff]
          %508 = vadd.xlane.f32.xlu0 %v504
          %v509 = vpop.xlane.xlu0 %508
          %510 = vadd.xlane.f32.xlu0 %v505
          %v511 = vpop.xlane.xlu0 %510
          %512 = vadd.xlane.f32.xlu0 %v506
          %v513 = vpop.xlane.xlu0 %512
          %514 = vadd.xlane.f32.xlu0 %v507
          %v515 = vpop.xlane.xlu0 %514
          %v520 = vlaneseq
          %v521 = vand.u32 %v520, 127
          %v522 = vlaneseq
          %v523 = vshrl.u32 %v522, 7
          %v524 = vsub.s32 %v521, %v523
          %v525 = vrot.slane %v509, %v524
          %v526 = vlaneseq
          %v527 = vshrl.u32 %v526, 7
          %v528 = vsub.s32 %v521, %v527
          %v529 = vrot.slane %v511, %v528
          %v530 = vlaneseq
          %v531 = vshrl.u32 %v530, 7
          %v532 = vsub.s32 %v521, %v531
          %v533 = vrot.slane %v513, %v532
          %v534 = vlaneseq
          %v535 = vshrl.u32 %v534, 7
          %v536 = vsub.s32 %v521, %v535
          %v537 = vrot.slane %v515, %v536
          %vm538 = vcmask 1041409
          %v539 = vsel %vm538, %v529, %v525
          %vm540 = vcmask 1042434
          %v541 = vsel %vm540, %v533, %v539
          %vm542 = vcmask 1043459
          %v543 = vsel %vm542, %v537, %v541
          %vm545 = vcmask 60416
          %v546 = vsel %vm545, %v543, 0.0
          %547 = vadd.xlane.f32.xlu0 %v546
          %v548 = vpop.xlane.xlu0 %547
          %v549 = vld [vmem:[#allocation3] sm:$0xff]
          %v550 = vld [vmem:[#allocation3 + $0x8] sm:$0xff]
          %v551 = vld [vmem:[#allocation3 + $0x10] sm:$0xff]
          %v552 = vld [vmem:[#allocation3 + $0x18] sm:$0xff]
          %553 = vadd.xlane.f32.xlu0 %v549
          %v554 = vpop.xlane.xlu0 %553
          %555 = vadd.xlane.f32.xlu0 %v550
          %v556 = vpop.xlane.xlu0 %555
          %557 = vadd.xlane.f32.xlu0 %v551
          %v558 = vpop.xlane.xlu0 %557
          %559 = vadd.xlane.f32.xlu0 %v552
          %v560 = vpop.xlane.xlu0 %559
          %v565 = vlaneseq
          %v566 = vshrl.u32 %v565, 7
          %v567 = vsub.s32 %v521, %v566
          %v568 = vrot.slane %v554, %v567
          %v569 = vlaneseq
          %v570 = vshrl.u32 %v569, 7
          %v571 = vsub.s32 %v521, %v570
          %v572 = vrot.slane %v556, %v571
          %v573 = vlaneseq
          %v574 = vshrl.u32 %v573, 7
          %v575 = vsub.s32 %v521, %v574
          %v576 = vrot.slane %v558, %v575
          %v577 = vlaneseq
          %v578 = vshrl.u32 %v577, 7
          %v579 = vsub.s32 %v521, %v578
          %v580 = vrot.slane %v560, %v579
          %v581 = vsel %vm538, %v572, %v568
          %v582 = vsel %vm540, %v576, %v581
          %v583 = vsel %vm542, %v580, %v582
          %v585 = vsel %vm545, %v583, 0.0
          %586 = vadd.xlane.f32.xlu0 %v585
          %v587 = vpop.xlane.xlu0 %586
          %v589 = vlaneseq
          %v590 = vshrl.u32 %v589, 7
          %v591 = vsub.s32 %v521, %v590
          %v592 = vrot.slane %v548, %v591
          %vm594 = vcmask 24576
          %595 = vst.msk [vmem:[%s232] sm:$0x1] %vm594, %v592
          %v597 = vlaneseq
          %v598 = vshrl.u32 %v597, 7
          %v599 = vsub.s32 %v521, %v598
          %v600 = vrot.slane %v587, %v599
          %602 = vst.msk [vmem:[%s232 + $0x1] sm:$0x1] %vm594, %v600
        $region44: #{tpu_custom_call.1} parent=27 // pred_fallthru
          _
        %s603 = sand.u32 %s111, 1
        %s604 = scalar_lea.sflag [#allocation6], %s603
        %s605 = sand.u32 %s111, 1
        %s606 = smul.addr %s605, 2
        %s607 = scalar_lea.vmem [#allocation9], %s606
        // Predicated region
        $region45: #{tpu_custom_call.1} parent=27 // pred_check
          %p608 = pneg %p121
        $region46: #{tpu_custom_call.1} parent=27 // pred_check_branch
          %610 = sbr.rel (%p608) target = $region48
        $region47: #{tpu_custom_call.1} parent=27 // pred_region
          %s612 = ssub.s32 32, 32
          %613 = vsyncadd %s604, %s612
          %s614 = sadd.s32 %s28, %s27
          %s615 = smul.addr %s614, 32
          %s616 = scalar_lea.hbm %s2, %s615
          %s618 = sshll.u32 %s607, 4
          %s619 = int_to_ptr.vmem [resolvable:$true] %s618
          %621 = dma.vmem_to_hbm [thread:$0]  %s619, 32, %s616, %s604
        $region48: #{tpu_custom_call.1} parent=27 // pred_fallthru
          _
      $region28: #{tpu_custom_call.1} parent=5 // pred_fallthru
        _
      %p622 = scmp.le.s32.totalorder 2, %s17
      // Predicated region
      $region49: #{tpu_custom_call.1} parent=5 // pred_check
        %p623 = pneg %p622
      $region50: #{tpu_custom_call.1} parent=5 // pred_check_branch
        %625 = sbr.rel (%p623) target = $region52
      $region51: #{tpu_custom_call.1} parent=5 // pred_region
        %s626 = ssub.s32 %s17, 2
        // Predicated region
        $region53: #{tpu_custom_call.1} parent=51 // pred_check
          %p627 = pneg %p127
        $region54: #{tpu_custom_call.1} parent=51 // pred_check_branch
          %629 = sbr.rel (%p627) target = $region56
        $region55: #{tpu_custom_call.1} parent=51 // pred_region
          %s630 = sand.u32 %s112, 1
          %s631 = scalar_lea.sflag [#allocation6], %s630
          %s632 = sand.u32 %s112, 1
          %s633 = smul.addr %s632, 2
          %s634 = scalar_lea.vmem [#allocation9], %s633
          %635 = dma.done %s631, 32
        $region56: #{tpu_custom_call.1} parent=51 // pred_fallthru
          _
      $region52: #{tpu_custom_call.1} parent=5 // pred_fallthru
        _
    $region6: #{tpu_custom_call.1} parent=1 // loop_footer
      %s21 = sadd.s32 1, %s17
    $region7: #{tpu_custom_call.1} parent=1 // loop_footer_branch
      %16 = sbr.rel target = $region3
    $region8: #{tpu_custom_call.1} parent=1 // loop_exit
      _
    %636 = vsyncpa [#allocation5], 1
    %s637 = scalar_lea.sflag [#allocation5], 1
    %638 = vsyncpa %s637, 1
    %639 = vsyncpa [#allocation8], 1
    %s640 = scalar_lea.sflag [#allocation8], 1
    %641 = vsyncpa %s640, 1
    %642 = vsyncpa [#allocation6], 1
    %s643 = scalar_lea.sflag [#allocation6], 1
    %644 = vsyncpa %s643, 1

</llo_original>
